<compile_context>
chip_gen: v7x
topology: tpu7x:2x2x1
jax: 0.10.0
libtpu: 0.0.40
codegen_flags: <defaults>
</compile_context>

<pallas_src>
import jax
import jax.numpy as jnp
from jax import lax
from jax.experimental import pallas as pl
from jax.experimental.pallas import tpu as pltpu


_LANE = 128


# ------------------------------ small helpers ------------------------------

def _round_up(x, m):
    return ((x + m - 1) // m) * m


def _pick_tile(total, target, align=8):
    """Largest multiple-of-`align` divisor of `total` that is <= target, else
    `total` (a block equal to the full dim is always legal)."""
    t = min(total, max(align, target))
    d = t - (t % align)
    while d >= align:
        if total % d == 0:
            return d
        d -= align
    return total


def _ensure_parallel_work(total, tile, other_parallel, align=16):
    """v7x has 2 TensorCores per chip: make sure the product of the parallel
    grid axes is >= 2 so both cores get work (no-op cost on v5e/v6e)."""
    if other_parallel * (total // tile) >= 2 or tile < 2 * align:
        return tile
    smaller = _pick_tile(total, tile // 2, align)
    if smaller < tile and other_parallel * (total // smaller) >= 2:
        return smaller
    return tile


def _vmem_budget_bytes():
    """Per-generation VMEM budget: ~3/4 of physical, capped at 100 MiB.
    -> ~96 MiB on v5e/v6e (128 MiB parts), ~48 MiB on v7x (64 MiB/TC)."""
    cap = 128 * 1024 * 1024
    try:
        info = pltpu.get_tpu_info()
        c = getattr(info, "vmem_capacity_bytes", None)
        if c:
            cap = int(c)
    except Exception:
        pass
    return min((cap * 3) // 4, 100 * 1024 * 1024)


def _cparams(dim_sems, vmem_limit):
    return pltpu.CompilerParams(
        dimension_semantics=dim_sems,
        vmem_limit_bytes=int(vmem_limit),
    )


# ----------------------------- Pallas kernels -------------------------------

def _proj_pool_kernel(xq_ref, w_ref, b_ref, o_ref, acc_ref):
    # Fused (g|phi) 1x1-conv + 2x2 max-pool; quadrant axis is a grid reduction.
    # Grid: (batch, m-tile, quadrant); quadrant (last axis) is "arbitrary".
    # xq_ref:  (1, 1, TM, Cin) bf16 — one 2x2-window quadrant of x2
    # w_ref:   (Cin, 2*Cip)    bf16 (= [Wg | Wphi] concatenated along Cout)
    # b_ref:   (1, 2*Cip)      f32
    # o_ref:   (1, TM, 2*Cip)  bf16 — max-pooled projection
    # acc_ref: (TM, 2*Cip)     f32 VMEM max-accumulator
    qi = pl.program_id(2)
    p = jnp.dot(xq_ref[0, 0], w_ref[...], preferred_element_type=jnp.float32)

    @pl.when(qi == 0)
    def _():
        acc_ref[...] = p

    @pl.when(qi > 0)
    def _():
        acc_ref[...] = jnp.maximum(acc_ref[...], p)

    @pl.when(qi == pl.num_programs(2) - 1)
    def _():
        # maxpool(conv(x) + b) == max(conv quadrants) + b (bias is per-channel)
        o_ref[0] = (acc_ref[...] + b_ref[...]).astype(o_ref.dtype)


def _attn_kernel(x_ref, wth_ref, bth_ref, g_ref, phi_ref, wout_ref, bout_ref,
                 o_ref, th_ref, acc_ref):
    # Grid: (batch, query-tile, m-tile); m (last axis) is the reduction.
    # x_ref:    (1, TQ, C)    residual, f32 (block constant across m)
    # wth_ref:  (C, Cip)      bf16 theta weights, 1/M folded in
    # bth_ref:  (1, Cip)      f32 theta bias, 1/M folded in
    # g_ref:    (1, TM, Cip)  bf16 pooled g projection
    # phi_ref:  (1, TM, Cip)  bf16 pooled phi projection
    # wout_ref: (Cip, C)      bf16    bout_ref: (1, C) f32
    # o_ref:    (1, TQ, C)    f32 (resident accumulator-style output)
    # th_ref:   (TQ, Cip)     bf16 VMEM scratch — theta for this (b, q) tile
    # acc_ref:  (TQ, Cip)     f32 VMEM scratch — accumulates y
    mi = pl.program_id(2)

    @pl.when(mi == 0)
    def _():
        th = jnp.dot(x_ref[0].astype(jnp.bfloat16), wth_ref[...],
                     preferred_element_type=jnp.float32) + bth_ref[...]
        th_ref[...] = th.astype(jnp.bfloat16)
        acc_ref[...] = jnp.zeros_like(acc_ref)

    theta = th_ref[...]                     # (TQ, Cip) bf16 (includes 1/M)
    phi = phi_ref[0]                        # (TM, Cip) bf16
    g = g_ref[0]                            # (TM, Cip) bf16

    # pairwise_weight tile: contract Cip dims directly (no transpose on MXU path).
    pw = lax.dot_general(theta, phi, (((1,), (1,)), ((), ())),
                         preferred_element_type=jnp.float32)       # (TQ, TM)
    acc_ref[...] += jnp.dot(pw.astype(jnp.bfloat16), g,
                            preferred_element_type=jnp.float32)    # (TQ, Cip)

    @pl.when(mi == pl.num_programs(2) - 1)
    def _():
        y = acc_ref[...].astype(jnp.bfloat16)
        mask = jnp.dot(y, wout_ref[...],
                       preferred_element_type=jnp.float32) + bout_ref[...]
        o_ref[0] = x_ref[0] + mask


# ------------------------------ Pallas wrappers ------------------------------

def proj_pool(x4, w, b, *, m_tile=512):
    """Fused 1x1-conv + 2x2 max-pool. x4: (4, n, M, Cin) bf16 quadrants,
    w: (Cin, Cout) bf16, b: (1, Cout) f32 -> (n, M, Cout) bf16."""
    _, n, M, Cin = x4.shape
    Cout = w.shape[1]
    budget = _vmem_budget_bytes()

    # Per-row resident bytes: streamed quadrant bf16 (2 buf) + out bf16 (2 buf)
    # + f32 accumulator.
    per_row = 4 * Cin + 4 * Cout + 4 * Cout
    w_bytes = Cin * Cout * 2
    tm_cap = max(16, (budget // 2 - w_bytes) // per_row)
    tm = _pick_tile(M, min(m_tile, tm_cap), 16)
    tm = _ensure_parallel_work(M, tm, n)

    return pl.pallas_call(
        _proj_pool_kernel,
        out_shape=jax.ShapeDtypeStruct((n, M, Cout), jnp.bfloat16),
        grid_spec=pltpu.PrefetchScalarGridSpec(
            num_scalar_prefetch=0,
            grid=(n, M // tm, 4),
            in_specs=[
                pl.BlockSpec((1, 1, tm, Cin), lambda bi, m, q: (q, bi, m, 0)),
                pl.BlockSpec((Cin, Cout), lambda bi, m, q: (0, 0)),
                pl.BlockSpec((1, Cout), lambda bi, m, q: (0, 0)),
            ],
            out_specs=pl.BlockSpec((1, tm, Cout), lambda bi, m, q: (bi, m, 0)),
            scratch_shapes=[pltpu.VMEM((tm, Cout), jnp.float32)],
        ),
        compiler_params=_cparams(("parallel", "parallel", "arbitrary"), budget),
    )(x4, w, b)


def nonlocal_attention(x_flat, wth, bth, gp, w_out, b_out, *,
                       q_tile=512, m_tile=512):
    """Tiled pairwise-attention with fused theta projection, conv_out and
    residual add. gp packs [g | phi] along its last dim."""
    n, N, C = x_flat.shape
    _, M, two_ci = gp.shape
    cip = two_ci // 2
    budget = _vmem_budget_bytes()

    # Per-query-row resident bytes: x f32 (2 buf) + out f32 (2 buf)
    # + theta bf16 scratch + acc f32 scratch.
    per_q = 8 * C + 8 * C + 2 * cip + 4 * cip
    tq_cap = max(16, (budget // 2) // per_q)
    tq = _pick_tile(N, min(q_tile, tq_cap), 16)
    tq = _ensure_parallel_work(N, tq, n)

    # Collapse the reduction axis when the whole pooled [g|phi] context fits
    # comfortably in VMEM (common with sub_sample=True).
    ctx_bytes = M * two_ci * 2                        # bf16
    if 2 * ctx_bytes <= budget // 4:
        tm = M
    else:
        per_m = 8 * cip                               # g + phi bf16, 2 buffers
        tm_cap = max(16, (budget // 4) // per_m)
        tm = _pick_tile(M, min(m_tile, tm_cap), 16)

    return pl.pallas_call(
        _attn_kernel,
        out_shape=jax.ShapeDtypeStruct((n, N, C), jnp.float32),
        grid_spec=pltpu.PrefetchScalarGridSpec(
            num_scalar_prefetch=0,
            grid=(n, N // tq, M // tm),
            in_specs=[
                pl.BlockSpec((1, tq, C), lambda b, q, m: (b, q, 0)),    # x
                pl.BlockSpec((C, cip), lambda b, q, m: (0, 0)),         # Wth
                pl.BlockSpec((1, cip), lambda b, q, m: (0, 0)),         # bth
                pl.BlockSpec((1, tm, cip), lambda b, q, m: (b, m, 0)),  # g
                pl.BlockSpec((1, tm, cip), lambda b, q, m: (b, m, 1)),  # phi
                pl.BlockSpec((cip, C), lambda b, q, m: (0, 0)),         # Wout
                pl.BlockSpec((1, C), lambda b, q, m: (0, 0)),           # bout
            ],
            out_specs=pl.BlockSpec((1, tq, C), lambda b, q, m: (b, q, 0)),
            scratch_shapes=[pltpu.VMEM((tq, cip), jnp.bfloat16),
                            pltpu.VMEM((tq, cip), jnp.float32)],
        ),
        compiler_params=_cparams(("parallel", "parallel", "arbitrary"), budget),
    )(x_flat, wth, bth, gp, gp, w_out, b_out)


# ------------------------------ Full forward ---------------------------------

def nonlocal2d_forward(x, x2, Wg, bg, Wth, bth, Wphi, bphi, Wout, bout):
    """Full NonLocal2D.forward. x, x2: NCHW float32. Weights: (Cin, Cout)."""
    n, C, H, W = x.shape
    _, _, H2, W2 = x2.shape
    Ci = Wg.shape[1]
    # TODO(synk): handle odd H2/W2 (PyTorch MaxPool2d(2) floors); assumes even here.
    assert H2 % 2 == 0 and W2 % 2 == 0
    N = H * W
    Hp, Wp = H2 // 2, W2 // 2
    M = Hp * Wp

    Cp = _round_up(C, _LANE)     # padded in_channels (lane-dense stores)
    Cip = _round_up(Ci, _LANE)   # padded inter_channels

    def pad2(a, r, c):
        return jnp.pad(a, ((0, r - a.shape[0]), (0, c - a.shape[1])))

    # Fold the dot-product 1/M scale into the theta projection (free at trace
    # time); pre-cast all MXU weights to bf16 once (biases stay f32 and are
    # added after the f32-accumulated matmul).
    inv_m = 1.0 / M
    Wth_b = (pad2(Wth, Cp, Cip) * inv_m).astype(jnp.bfloat16)
    bth_f = pad2(bth, 1, Cip) * inv_m
    Wcat_b = jnp.concatenate([pad2(Wg, Cp, Cip), pad2(Wphi, Cp, Cip)],
                             axis=1).astype(jnp.bfloat16)
    bcat_f = jnp.concatenate([pad2(bg, 1, Cip), pad2(bphi, 1, Cip)], axis=1)
    Wout_b = pad2(Wout, Cip, Cp).astype(jnp.bfloat16)
    bout_f = pad2(bout, 1, Cp)

    # x: NCHW -> flat channels-last (n, N, Cp) f32 (residual + theta input).
    x_flat = jnp.transpose(x, (0, 2, 3, 1)).reshape(n, N, C)
    x_flat = jnp.pad(x_flat, ((0, 0), (0, 0), (0, Cp - C)))

    # x2: NCHW -> four 2x2-window quadrants, channels-last bf16: (4, n, M, Cp).
    x2q = x2.reshape(n, C, Hp, 2, Wp, 2)
    x2q = jnp.transpose(x2q, (3, 5, 0, 2, 4, 1)).reshape(4, n, M, C)
    x2q = jnp.pad(x2q, ((0, 0), (0, 0), (0, 0), (0, Cp - C))).astype(jnp.bfloat16)

    # Fused g|phi projection + 2x2 max-pool -> (n, M, 2*Cip) bf16.
    gp = proj_pool(x2q, Wcat_b, bcat_f)

    # Fused theta + tiled attention + conv_out + residual.
    out_flat = nonlocal_attention(x_flat, Wth_b, bth_f, gp, Wout_b, bout_f)
    out = out_flat[:, :, :C].reshape(n, H, W, C)
    return jnp.transpose(out, (0, 3, 1, 2))


# --------------------------- Pure-JAX reference ------------------------------

def reference_nchw(x, x2, Wg, bg, Wth, bth, Wphi, bphi, Wout, bout):
    """Mirror the PyTorch forward exactly, in NCHW, with plain jnp ops (f32)."""
    n, C, H, W = x.shape
    Ci = Wg.shape[1]

    def conv1x1_nchw(z, Wt, bt):
        return jnp.einsum("nchw,cd->ndhw", z, Wt) + bt.reshape(1, -1, 1, 1)

    def maxpool2x2_nchw(z):
        nb, cc, hh, ww = z.shape
        return z.reshape(nb, cc, hh // 2, 2, ww // 2, 2).max(axis=(3, 5))

    g_x2 = maxpool2x2_nchw(conv1x1_nchw(x2, Wg, bg)).reshape(n, Ci, -1)
    g_x2 = g_x2.transpose(0, 2, 1)                                   # (n, M, Ci)
    theta_x = conv1x1_nchw(x, Wth, bth).reshape(n, Ci, -1).transpose(0, 2, 1)
    phi_x2 = maxpool2x2_nchw(conv1x1_nchw(x2, Wphi, bphi)).reshape(n, Ci, -1)

    pw = jnp.einsum("nqc,ncm->nqm", theta_x, phi_x2)
    pw = pw / pw.shape[-1]                                           # dot_product
    y = jnp.einsum("nqm,nmc->nqc", pw, g_x2)
    y = y.transpose(0, 2, 1).reshape(n, Ci, H, W)
    mask = conv1x1_nchw(y, Wout, bout)
    return x + mask


# ------------------------------- Main ----------------------------------------

if __name__ == "__main__":
    key = jax.random.PRNGKey(0)
    n, C, h, w = 2, 4, 16, 16
    reduction = 2
    Ci = C // reduction
    std = 0.01

    ks = jax.random.split(key, 8)
    x = jax.random.normal(ks[0], (n, C, h, w), jnp.float32)
    x2 = jax.random.normal(ks[1], (n, C, h, w), jnp.float32)

    # normal_init(std=0.01), bias=0 (matches module init_weights); stored as
    # (Cin, Cout) = torch weight (Cout, Cin, 1, 1) squeezed + transposed.
    Wg = jax.random.normal(ks[2], (C, Ci), jnp.float32) * std
    Wth = jax.random.normal(ks[3], (C, Ci), jnp.float32) * std
    Wphi = jax.random.normal(ks[4], (C, Ci), jnp.float32) * std
    Wout = jax.random.normal(ks[5], (Ci, C), jnp.float32) * std
    bg = jnp.zeros((1, Ci), jnp.float32)
    bth = jnp.zeros((1, Ci), jnp.float32)
    bphi = jnp.zeros((1, Ci), jnp.float32)
    bout = jnp.zeros((1, C), jnp.float32)

    out = nonlocal2d_forward(x, x2, Wg, bg, Wth, bth, Wphi, bphi, Wout, bout)
    out = jax.block_until_ready(out)

    ref = reference_nchw(x, x2, Wg, bg, Wth, bth, Wphi, bphi, Wout, bout)
    assert out.shape == (n, C, h, w)
    # bf16 MXU operands with f32 accumulation (documented precision contract).
    assert jnp.allclose(out, ref, atol=2e-4, rtol=2e-3), "mismatch vs reference"

    print("KERNEL_OK")
</pallas_src>

<mosaic_0001>
module attributes {stable_mosaic.version = 11 : i64} {
  func.func @_proj_pool_kernel(%arg0: i32, %arg1: i32, %arg2: i32, %arg3: memref<1x1x64x128xbf16, #tpu.memory_space<vmem>>, %arg4: memref<128x256xbf16, #tpu.memory_space<vmem>>, %arg5: memref<1x256xf32, #tpu.memory_space<vmem>>, %arg6: memref<1x64x256xbf16, #tpu.memory_space<vmem>>, %arg7: memref<64x256xf32, #tpu.memory_space<vmem>>) attributes {dimension_semantics = [#tpu.dimension_semantics<parallel>, #tpu.dimension_semantics<parallel>, #tpu.dimension_semantics<arbitrary>], iteration_bounds = array<i64: 2, 1, 4>, scalar_prefetch = 0 : i64, scratch_operands = 1 : i64, tpu.core_type = #tpu.core_type<tc>, window_params = [{transform_indices = @transform_0, window_bounds = array<i64: 1, 1, 64, 128>}, {pipeline_mode = #tpu.pipeline_mode<synchronous>, transform_indices = @transform_1, window_bounds = array<i64: 128, 256>}, {pipeline_mode = #tpu.pipeline_mode<synchronous>, transform_indices = @transform_2, window_bounds = array<i64: 1, 256>}, {transform_indices = @transform_3, window_bounds = array<i64: 1, 64, 256>}]} {
    %c0 = arith.constant 0 : index
    %c0_0 = arith.constant 0 : index
    %c0_1 = arith.constant 0 : index
    %c0_2 = arith.constant 0 : index
    %0 = vector.load %arg3[%c0, %c0_0, %c0_1, %c0_2] : memref<1x1x64x128xbf16, #tpu.memory_space<vmem>>, vector<1x1x64x128xbf16>
    %1 = vector.shape_cast %0 : vector<1x1x64x128xbf16> to vector<64x128xbf16>
    %c0_3 = arith.constant 0 : index
    %c0_4 = arith.constant 0 : index
    %2 = vector.load %arg4[%c0_3, %c0_4] : memref<128x256xbf16, #tpu.memory_space<vmem>>, vector<128x256xbf16>
    %cst = arith.constant dense<0.000000e+00> : vector<64x256xf32>
    %3 = tpu.matmul %1, %2, %cst {dimension_numbers = #tpu.dot_dimension_numbers<[1], [0], [0], [1], [0, 0, 1, 1], [], []>} : vector<64x128xbf16>, vector<128x256xbf16>, vector<64x256xf32> -> vector<64x256xf32>
    %c0_i32 = arith.constant 0 : i32
    %4 = arith.cmpi eq, %arg2, %c0_i32 : i32
    %5 = arith.extui %4 : i1 to i32
    %c0_i32_5 = arith.constant 0 : i32
    %6 = arith.cmpi ne, %5, %c0_i32_5 : i32
    scf.if %6 {
      %c0_9 = arith.constant 0 : index
      %c0_10 = arith.constant 0 : index
      %13 = vector.load %arg7[%c0_9, %c0_10] : memref<64x256xf32, #tpu.memory_space<vmem>>, vector<64x256xf32>
      tpu.vector_store %arg7[%c0_9, %c0_10], %3 {strides = array<i32>} : memref<64x256xf32, #tpu.memory_space<vmem>>, vector<64x256xf32>,
    } else {
    }
    %c0_i32_6 = arith.constant 0 : i32
    %7 = arith.cmpi sgt, %arg2, %c0_i32_6 : i32
    %8 = arith.extui %7 : i1 to i32
    %c0_i32_7 = arith.constant 0 : i32
    %9 = arith.cmpi ne, %8, %c0_i32_7 : i32
    scf.if %9 {
      %c0_9 = arith.constant 0 : index
      %c0_10 = arith.constant 0 : index
      %13 = vector.load %arg7[%c0_9, %c0_10] : memref<64x256xf32, #tpu.memory_space<vmem>>, vector<64x256xf32>
      %14 = arith.maximumf %13, %3 : vector<64x256xf32>
      %c0_11 = arith.constant 0 : index
      %c0_12 = arith.constant 0 : index
      %15 = vector.load %arg7[%c0_11, %c0_12] : memref<64x256xf32, #tpu.memory_space<vmem>>, vector<64x256xf32>
      tpu.vector_store %arg7[%c0_11, %c0_12], %14 {strides = array<i32>} : memref<64x256xf32, #tpu.memory_space<vmem>>, vector<64x256xf32>,
    } else {
    }
    %c3_i32 = arith.constant 3 : i32
    %10 = arith.cmpi eq, %arg2, %c3_i32 : i32
    %11 = arith.extui %10 : i1 to i32
    %c0_i32_8 = arith.constant 0 : i32
    %12 = arith.cmpi ne, %11, %c0_i32_8 : i32
    scf.if %12 {
      %c0_9 = arith.constant 0 : index
      %c0_10 = arith.constant 0 : index
      %13 = vector.load %arg7[%c0_9, %c0_10] : memref<64x256xf32, #tpu.memory_space<vmem>>, vector<64x256xf32>
      %c0_11 = arith.constant 0 : index
      %c0_12 = arith.constant 0 : index
      %14 = vector.load %arg5[%c0_11, %c0_12] : memref<1x256xf32, #tpu.memory_space<vmem>>, vector<1x256xf32>
      %15 = vector.broadcast %14 : vector<1x256xf32> to vector<64x256xf32>
      %16 = arith.addf %13, %15 : vector<64x256xf32>
      %17 = arith.truncf %16 : vector<64x256xf32> to vector<64x256xbf16>
      %c0_13 = arith.constant 0 : index
      %c0_14 = arith.constant 0 : index
      %c0_15 = arith.constant 0 : index
      %18 = vector.load %arg6[%c0_13, %c0_14, %c0_15] : memref<1x64x256xbf16, #tpu.memory_space<vmem>>, vector<1x64x256xbf16>
      %19 = vector.shape_cast %18 : vector<1x64x256xbf16> to vector<64x256xbf16>
      %20 = vector.shape_cast %17 : vector<64x256xbf16> to vector<1x64x256xbf16>
      tpu.vector_store %arg6[%c0_13, %c0_14, %c0_15], %20 {strides = array<i32>} : memref<1x64x256xbf16, #tpu.memory_space<vmem>>, vector<1x64x256xbf16>,
    } else {
    }
    return
  }
  func.func @transform_0(%arg0: i32, %arg1: i32, %arg2: i32) -> (i32, i32, i32, i32) {
    %c0_i32 = arith.constant 0 : i32
    %c0_i32_0 = arith.constant 0 : i32
    return %arg2, %arg0, %arg1, %c0_i32 : i32, i32, i32, i32
  }
  func.func @transform_1(%arg0: i32, %arg1: i32, %arg2: i32) -> (i32, i32) {
    %c0_i32 = arith.constant 0 : i32
    %c0_i32_0 = arith.constant 0 : i32
    %c0_i32_1 = arith.constant 0 : i32
    return %c0_i32, %c0_i32_0 : i32, i32
  }
  func.func @transform_2(%arg0: i32, %arg1: i32, %arg2: i32) -> (i32, i32) {
    %c0_i32 = arith.constant 0 : i32
    %c0_i32_0 = arith.constant 0 : i32
    %c0_i32_1 = arith.constant 0 : i32
    return %c0_i32, %c0_i32_0 : i32, i32
  }
  func.func @transform_3(%arg0: i32, %arg1: i32, %arg2: i32) -> (i32, i32, i32) {
    %c0_i32 = arith.constant 0 : i32
    %c0_i32_0 = arith.constant 0 : i32
    return %arg0, %arg1, %c0_i32 : i32, i32, i32
  }
}

</mosaic_0001>

<llo_original>
// kernel: tpu_custom_call.1
$region0: #{tpu_custom_call.1}
  #allocation0 [shape = 'u32[]', space=smem, size = 0x4, offset = 0x4, fixed_abs, tag = 'smem constant byte address 0x4 - core index']
  #allocation1 [shape = 'u32[144,128]{1,0:T(1,128)}', space=vmem, size = 0x12000, scoped, tag = 'internal scratch']
  #allocation2 [shape = 'f32[64,256]{1,0:T(8,128)}', space=vmem, size = 0x10000, scoped, tag = 'scratch operand']
  %s0 = inlined_call_operand.hbm [shape: bf16[4,2,64,128], index: 0, kind: input, shape index: {}]
  %s1 = inlined_call_operand.hbm [shape: bf16[128,256], index: 1, kind: input, shape index: {}]
  %s2 = inlined_call_operand.hbm [shape: f32[1,256], index: 2, kind: input, shape index: {}]
  %s3 = inlined_call_operand.hbm [shape: bf16[2,64,256], index: 3, kind: output, shape index: {}]
  %s4 = sld [smem:[#allocation0]]
  $region69: #{tpu_custom_call.1} parent=0
    _
  %s6 = ssub.s32 1, %s4
  %s7 = scalar_select 0, %s6, %s4
  $region1: #{tpu_custom_call.1} parent=0
    #allocation3 [shape = 'u8[32768]{0}', space=vmem, size = 0x8000, scoped, tag = 'input window, operand 0']
    #allocation4 [shape = 's32[2]{0}', space=sflag, size = 0x8, scoped, tag = 'scoped memory for tpu_custom_call.1']
    #allocation5 [shape = 's32[2]{0}', space=sflag, size = 0x8, scoped, tag = 'scoped memory for tpu_custom_call.1']
    #allocation6 [shape = 'u8[65536]{0}', space=vmem, size = 0x10000, scoped, tag = 'input window, operand 1, single buffered']
    #allocation7 [shape = 's32[1]{0}', space=sflag, size = 0x4, scoped, tag = 'scoped memory for tpu_custom_call.1']
    #allocation8 [shape = 'u8[1024]{0}', space=vmem, size = 0x400, scoped, tag = 'input window, operand 2, single buffered']
    #allocation9 [shape = 'u8[65536]{0}', space=vmem, size = 0x10000, scoped, tag = 'output window, operand 0']
    %8 = vsyncpa [#allocation4], 0
    %s9 = scalar_lea.sflag [#allocation4], 1
    %10 = vsyncpa %s9, 0
    %11 = vsyncpa [#allocation7], 0
    %12 = vsyncpa [#allocation5], 0
    %s13 = scalar_lea.sflag [#allocation5], 1
    %14 = vsyncpa %s13, 0
    loop: start=0, step=1, limit=10
    $region2: #{tpu_custom_call.1} parent=1 // loop_pre_header
      _
    $region3: #{tpu_custom_call.1} parent=1 // loop_header
      %s16 = sphi 0, %s20
      %p17 = scmp.ge.s32.totalorder %s16, 10
      %s23 = sphi 0, %s42
      %s24 = sphi 0, %s38
      %s25 = sphi 0, %s34
      %s26 = sphi 0, %s23
      %s27 = sphi 0, %s24
      %s28 = sphi 0, %s25
      %s29 = sphi 0, %s26
      %s30 = sphi 0, %s27
      %s31 = sphi 0, %s28
      %s49 = sphi 0, %s51
      %s52 = sphi 0, %s49
      %s53 = sphi 0, %s52
      %s69 = sphi 0, %s53
      %s73 = sphi 0, %s73
      %s75 = sphi 0, %s73
      %s76 = sphi 0, %s75
      %s90 = sphi 0, %s76
      %s94 = sphi 0, %s94
      %s96 = sphi 0, %s94
      %s97 = sphi 0, %s96
      %s111 = sphi 0, %s97
      %s119 = sphi 0, %s121
      %s122 = sphi 0, %s119
      %s123 = sphi 0, %s122
      %s139 = sphi 0, %s123
    $region4: #{tpu_custom_call.1} parent=1 // loop_header_branch
      %19 = sbr.rel (%p17) target = $region8
    $region5: #{tpu_custom_call.1} parent=1 // loop_body
      %s21 = ssub.s32 %s16, 1
      %s22 = ssub.s32 %s16, 2
      %s32 = sadd.s32 1, %s25
      %p33 = scmp.ge.s32.totalorder %s32, 4
      %s34 = scalar_select %p33, 0, %s32
      %s35 = sadd.s32 1, %s24
      %s36 = scalar_select %p33, %s35, %s24
      %p37 = scmp.ge.s32.totalorder %s36, 1
      %s38 = scalar_select %p37, 0, %s36
      %s39 = sadd.s32 1, %s23
      %s40 = scalar_select %p37, %s39, %s23
      %p41 = scmp.ge.s32.totalorder %s40, 2
      %s42 = scalar_select %p41, 0, %s40
      %s43 = ssub.s32 %s25, %s34
      %s44 = ssub.s32 %s23, %s42
      %s45 = sor.u32 %s43, %s44
      %s46 = ssub.s32 %s24, %s38
      %s47 = sor.u32 %s45, %s46
      %p48 = scmp.eq.s32.totalorder %s47, 0
      %s50 = sadd.s32 %s49, 1
      %s51 = scalar_select %p48, %s49, %s50
      %p54 = pneg %p48
      %p55 = scmp.eq.s32.totalorder %s16, 7
      %p56 = por %p54, %p55
      %p57 = scmp.ne.s32.totalorder %s49, %s52
      %p58 = scmp.eq.s32.totalorder %s16, 0
      %p59 = por %p57, %p58
      %p60 = scmp.ne.s32.totalorder %s49, %s52
      %p61 = scmp.eq.s32.totalorder %s21, 7
      %p62 = por %p60, %p61
      %p63 = scmp.ne.s32.totalorder %s52, %s53
      %p64 = scmp.eq.s32.totalorder %s21, 0
      %p65 = por %p63, %p64
      %p66 = scmp.ne.s32.totalorder %s52, %s53
      %p67 = scmp.eq.s32.totalorder %s22, 7
      %p68 = por %p66, %p67
      %p70 = scmp.ne.s32.totalorder %s53, %s69
      %p71 = scmp.eq.s32.totalorder %s22, 0
      %p72 = por %p70, %p71
      %s74 = sadd.s32 %s73, 1
      %p77 = scmp.eq.s32.totalorder %s16, 7
      %p78 = scmp.ne.s32.totalorder %s73, %s75
      %p79 = scmp.eq.s32.totalorder %s16, 0
      %p80 = por %p78, %p79
      %p81 = scmp.ne.s32.totalorder %s73, %s75
      %p82 = scmp.eq.s32.totalorder %s21, 7
      %p83 = por %p81, %p82
      %p84 = scmp.ne.s32.totalorder %s75, %s76
      %p85 = scmp.eq.s32.totalorder %s21, 0
      %p86 = por %p84, %p85
      %p87 = scmp.ne.s32.totalorder %s75, %s76
      %p88 = scmp.eq.s32.totalorder %s22, 7
      %p89 = por %p87, %p88
      %p91 = scmp.ne.s32.totalorder %s76, %s90
      %p92 = scmp.eq.s32.totalorder %s22, 0
      %p93 = por %p91, %p92
      %s95 = sadd.s32 %s94, 1
      %p98 = scmp.eq.s32.totalorder %s16, 7
      %p99 = scmp.ne.s32.totalorder %s94, %s96
      %p100 = scmp.eq.s32.totalorder %s16, 0
      %p101 = por %p99, %p100
      %p102 = scmp.ne.s32.totalorder %s94, %s96
      %p103 = scmp.eq.s32.totalorder %s21, 7
      %p104 = por %p102, %p103
      %p105 = scmp.ne.s32.totalorder %s96, %s97
      %p106 = scmp.eq.s32.totalorder %s21, 0
      %p107 = por %p105, %p106
      %p108 = scmp.ne.s32.totalorder %s96, %s97
      %p109 = scmp.eq.s32.totalorder %s22, 7
      %p110 = por %p108, %p109
      %p112 = scmp.ne.s32.totalorder %s97, %s111
      %p113 = scmp.eq.s32.totalorder %s22, 0
      %p114 = por %p112, %p113
      %s115 = ssub.s32 %s23, %s42
      %s116 = ssub.s32 %s24, %s38
      %s117 = sor.u32 %s115, %s116
      %p118 = scmp.eq.s32.totalorder %s117, 0
      %s120 = sadd.s32 %s119, 1
      %s121 = scalar_select %p118, %s119, %s120
      %p124 = pneg %p118
      %p125 = scmp.eq.s32.totalorder %s16, 7
      %p126 = por %p124, %p125
      %p127 = scmp.ne.s32.totalorder %s119, %s122
      %p128 = scmp.eq.s32.totalorder %s16, 0
      %p129 = por %p127, %p128
      %p130 = scmp.ne.s32.totalorder %s119, %s122
      %p131 = scmp.eq.s32.totalorder %s21, 7
      %p132 = por %p130, %p131
      %p133 = scmp.ne.s32.totalorder %s122, %s123
      %p134 = scmp.eq.s32.totalorder %s21, 0
      %p135 = por %p133, %p134
      %p136 = scmp.ne.s32.totalorder %s122, %s123
      %p137 = scmp.eq.s32.totalorder %s22, 7
      %p138 = por %p136, %p137
      %p140 = scmp.ne.s32.totalorder %s123, %s139
      %p141 = scmp.eq.s32.totalorder %s22, 0
      %p142 = por %p140, %p141
      %p143 = scmp.le.s32.totalorder 1, %s16
      %p144 = scmp.lt.s32.totalorder %s16, 9
      %p145 = pnand %p143, %p144
      %p146 = pneg %p145
      // Predicated region
      $region9: #{tpu_custom_call.1} parent=5 // pred_check
        _
      $region10: #{tpu_custom_call.1} parent=5 // pred_check_branch
        %148 = sbr.rel (%p145) target = $region12
      $region11: #{tpu_custom_call.1} parent=5 // pred_region
        %s149 = ssub.s32 %s16, 1
        // Predicated region
        $region13: #{tpu_custom_call.1} parent=11 // pred_check
          %p150 = pneg %p86
        $region14: #{tpu_custom_call.1} parent=11 // pred_check_branch
          %152 = sbr.rel (%p150) target = $region16
        $region15: #{tpu_custom_call.1} parent=11 // pred_region
          %s154 = ssub.s32 2048, 2048
          %155 = vsyncadd [#allocation7], %s154
          %s156 = sshll.u32 [#allocation6], 4
          %s157 = int_to_ptr.vmem [resolvable:$true] %s156
          %162 = dma.hbm_to_vmem [thread:$0]  %s1, 2048, %s157, [#allocation7], 128, 128, 8
        $region16: #{tpu_custom_call.1} parent=11 // pred_fallthru
          _
        // Predicated region
        $region17: #{tpu_custom_call.1} parent=11 // pred_check
          %p163 = pneg %p107
        $region18: #{tpu_custom_call.1} parent=11 // pred_check_branch
          %165 = sbr.rel (%p163) target = $region20
        $region19: #{tpu_custom_call.1} parent=11 // pred_region
          %s167 = ssub.s32 32, 32
          %168 = vsyncadd [#allocation7], %s167
          %s170 = sshll.u32 [#allocation8], 4
          %s171 = int_to_ptr.vmem [resolvable:$true] %s170
          %173 = dma.hbm_to_vmem [thread:$0]  %s2, 32, %s171, [#allocation7]
        $region20: #{tpu_custom_call.1} parent=11 // pred_fallthru
          _
      $region12: #{tpu_custom_call.1} parent=5 // pred_fallthru
        _
      %p174 = scmp.lt.s32.totalorder %s16, 8
      // Predicated region
      $region21: #{tpu_custom_call.1} parent=5 // pred_check
        %p175 = pneg %p174
      $region22: #{tpu_custom_call.1} parent=5 // pred_check_branch
        %177 = sbr.rel (%p175) target = $region24
      $region23: #{tpu_custom_call.1} parent=5 // pred_region
        // Predicated region
        $region25: #{tpu_custom_call.1} parent=23 // pred_check
          %p178 = pneg %p59
        $region26: #{tpu_custom_call.1} parent=23 // pred_check_branch
          %180 = sbr.rel (%p178) target = $region28
        $region27: #{tpu_custom_call.1} parent=23 // pred_region
          %s181 = sand.u32 %s49, 1
          %s182 = scalar_lea.sflag [#allocation4], %s181
          %s183 = sand.u32 %s49, 1
          %s184 = smul.addr %s183, 32
          %s185 = scalar_lea.vmem [#allocation3], %s184
          %s186 = smul.u32 8, %s24
          %s188 = ssub.s32 512, 512
          %189 = vsyncadd %s182, %s188
          %s190 = smul.addr %s23, 8
          %s191 = sadd.s32 %s186, %s190
          %s192 = smul.addr %s25, 16
          %s193 = sadd.s32 %s191, %s192
          %s194 = smul.addr %s193, 64
          %s195 = scalar_lea.hbm %s0, %s194
          %s196 = sshll.u32 %s185, 4
          %s197 = int_to_ptr.vmem [resolvable:$true] %s196
          %202 = dma.hbm_to_vmem [thread:$0]  %s195, 512, %s197, %s182, 64, 64, 4
        $region28: #{tpu_custom_call.1} parent=23 // pred_fallthru
          _
      $region24: #{tpu_custom_call.1} parent=5 // pred_fallthru
        _
      %p203 = scmp.le.s32.totalorder 1, %s16
      %p204 = scmp.lt.s32.totalorder %s16, 9
      %p205 = pnand %p203, %p204
      %p206 = pneg %p205
      // Predicated region
      $region29: #{tpu_custom_call.1} parent=5 // pred_check
        _
      $region30: #{tpu_custom_call.1} parent=5 // pred_check_branch
        %208 = sbr.rel (%p205) target = $region32
      $region31: #{tpu_custom_call.1} parent=5 // pred_region
        %s209 = ssub.s32 %s16, 1
        %s210 = sand.u32 %s52, 1
        %s211 = scalar_lea.sflag [#allocation4], %s210
        %s212 = sand.u32 %s52, 1
        %s213 = smul.addr %s212, 32
        %s214 = scalar_lea.vmem [#allocation3], %s213
        // Predicated region
        $region33: #{tpu_custom_call.1} parent=31 // pred_check
          %p215 = pneg %p65
        $region34: #{tpu_custom_call.1} parent=31 // pred_check_branch
          %217 = sbr.rel (%p215) target = $region36
        $region35: #{tpu_custom_call.1} parent=31 // pred_region
          %218 = dma.done %s211, 512
        $region36: #{tpu_custom_call.1} parent=31 // pred_fallthru
          _
        // Predicated region
        $region37: #{tpu_custom_call.1} parent=31 // pred_check
          %p219 = pneg %p86
        $region38: #{tpu_custom_call.1} parent=31 // pred_check_branch
          %221 = sbr.rel (%p219) target = $region40
        $region39: #{tpu_custom_call.1} parent=31 // pred_region
          %222 = dma.done [#allocation7], 2048
        $region40: #{tpu_custom_call.1} parent=31 // pred_fallthru
          _
        // Predicated region
        $region41: #{tpu_custom_call.1} parent=31 // pred_check
          %p223 = pneg %p107
        $region42: #{tpu_custom_call.1} parent=31 // pred_check_branch
          %225 = sbr.rel (%p223) target = $region44
        $region43: #{tpu_custom_call.1} parent=31 // pred_region
          %226 = dma.done [#allocation7], 32
        $region44: #{tpu_custom_call.1} parent=31 // pred_fallthru
          _
        %s227 = sand.u32 %s52, 1
        %s228 = scalar_lea.sflag [#allocation4], %s227
        %s229 = sand.u32 %s52, 1
        %s230 = smul.addr %s229, 32
        %s231 = scalar_lea.vmem [#allocation3], %s230
        %p232 = pneg %p65
        %p233 = pneg %p62
        %p234 = pneg %p86
        %p235 = pneg %p83
        %p236 = pneg %p107
        %p237 = pneg %p104
        %p238 = pneg %p135
        %p239 = pneg %p132
        %s240 = sand.u32 %s122, 1
        %s241 = scalar_lea.sflag [#allocation5], %s240
        %s242 = sand.u32 %s122, 1
        %s243 = smul.addr %s242, 64
        %s244 = scalar_lea.vmem [#allocation9], %s243
        %s245 = smul.u32 8, %s27
        %s246 = smul.u32 8, %s27
        %v248 = vld [vmem:[%s214] sm:$0xf]
        %v249 = vld [vmem:[%s214 + $0x4] sm:$0xf]
        %v250 = vld [vmem:[%s214 + $0x8] sm:$0xf]
        %v251 = vld [vmem:[%s214 + $0xc] sm:$0xf]
        %v252 = vld [vmem:[%s214 + $0x10] sm:$0xf]
        %v253 = vld [vmem:[%s214 + $0x14] sm:$0xf]
        %v254 = vld [vmem:[%s214 + $0x18] sm:$0xf]
        %v255 = vld [vmem:[%s214 + $0x1c] sm:$0xf]
        %v256 = vld [vmem:[#allocation6] sm:$0xff]
        %v257 = vld [vmem:[#allocation6 + $0x8] sm:$0xff]
        %v258 = vld [vmem:[#allocation6 + $0x10] sm:$0xff]
        %v259 = vld [vmem:[#allocation6 + $0x18] sm:$0xff]
        %v260 = vld [vmem:[#allocation6 + $0x20] sm:$0xff]
        %v261 = vld [vmem:[#allocation6 + $0x28] sm:$0xff]
        %v262 = vld [vmem:[#allocation6 + $0x30] sm:$0xff]
        %v263 = vld [vmem:[#allocation6 + $0x38] sm:$0xff]
        %v264 = vld [vmem:[#allocation6 + $0x40] sm:$0xff]
        %v265 = vld [vmem:[#allocation6 + $0x48] sm:$0xff]
        %v266 = vld [vmem:[#allocation6 + $0x50] sm:$0xff]
        %v267 = vld [vmem:[#allocation6 + $0x58] sm:$0xff]
        %v268 = vld [vmem:[#allocation6 + $0x60] sm:$0xff]
        %v269 = vld [vmem:[#allocation6 + $0x68] sm:$0xff]
        %v270 = vld [vmem:[#allocation6 + $0x70] sm:$0xff]
        %v271 = vld [vmem:[#allocation6 + $0x78] sm:$0xff]
        %v280 = vunpack.c.l.b16 %v248
        %v281 = vunpack.c.l.b16 %v249
        %v282 = vunpack.c.l.b16 %v250
        %v283 = vunpack.c.l.b16 %v251
        %v284 = vunpack.c.l.b16 %v252
        %v285 = vunpack.c.l.b16 %v253
        %v286 = vunpack.c.l.b16 %v254
        %v287 = vunpack.c.l.b16 %v255
        %v288 = vpack.c.b16 %v281, %v280
        %v289 = vpack.c.b16 %v283, %v282
        %v290 = vpack.c.b16 %v285, %v284
        %v291 = vpack.c.b16 %v287, %v286
        %v312 = vunpack.c.l.b16 %v256
        %v313 = vunpack.c.h.b16 %v256
        %v314 = vunpack.c.l.b16 %v257
        %v315 = vunpack.c.h.b16 %v257
        %v316 = vunpack.c.l.b16 %v258
        %v317 = vunpack.c.h.b16 %v258
        %v318 = vunpack.c.l.b16 %v259
        %v319 = vunpack.c.h.b16 %v259
        %v320 = vunpack.c.l.b16 %v260
        %v321 = vunpack.c.h.b16 %v260
        %v322 = vunpack.c.l.b16 %v261
        %v323 = vunpack.c.h.b16 %v261
        %v324 = vunpack.c.l.b16 %v262
        %v325 = vunpack.c.h.b16 %v262
        %v326 = vunpack.c.l.b16 %v263
        %v327 = vunpack.c.h.b16 %v263
        %v328 = vunpack.c.l.b16 %v264
        %v329 = vunpack.c.h.b16 %v264
        %v330 = vunpack.c.l.b16 %v265
        %v331 = vunpack.c.h.b16 %v265
        %v332 = vunpack.c.l.b16 %v266
        %v333 = vunpack.c.h.b16 %v266
        %v334 = vunpack.c.l.b16 %v267
        %v335 = vunpack.c.h.b16 %v267
        %v336 = vunpack.c.l.b16 %v268
        %v337 = vunpack.c.h.b16 %v268
        %v338 = vunpack.c.l.b16 %v269
        %v339 = vunpack.c.h.b16 %v269
        %v340 = vunpack.c.l.b16 %v270
        %v341 = vunpack.c.h.b16 %v270
        %v342 = vunpack.c.l.b16 %v271
        %v343 = vunpack.c.h.b16 %v271
        %v344 = vpack.c.b16 %v314, %v312
        %v345 = vpack.c.b16 %v315, %v313
        %v346 = vpack.c.b16 %v318, %v316
        %v347 = vpack.c.b16 %v319, %v317
        %v348 = vpack.c.b16 %v322, %v320
        %v349 = vpack.c.b16 %v323, %v321
        %v350 = vpack.c.b16 %v326, %v324
        %v351 = vpack.c.b16 %v327, %v325
        %v352 = vpack.c.b16 %v330, %v328
        %v353 = vpack.c.b16 %v331, %v329
        %v354 = vpack.c.b16 %v334, %v332
        %v355 = vpack.c.b16 %v335, %v333
        %v356 = vpack.c.b16 %v338, %v336
        %v357 = vpack.c.b16 %v339, %v337
        %v358 = vpack.c.b16 %v342, %v340
        %v359 = vpack.c.b16 %v343, %v341
        %376 = vmatprep.subr.bf16.mxu0 %v345
        %377 = vmatpush1.bf16.msra.mxu0 %v344
        %378 = vmatprep.subr.bf16.mxu0 %v347
        %379 = vmatpush1.bf16.msra.mxu0 %v346
        %380 = vmatprep.subr.bf16.mxu0 %v349
        %381 = vmatpush1.bf16.msra.mxu0 %v348
        %382 = vmatprep.subr.bf16.mxu0 %v351
        %383 = vmatpush1.bf16.msra.mxu0 %v350
        %384 = vmatprep.subr.bf16.mxu0 %v353
        %385 = vmatpush1.bf16.msra.mxu0 %v352
        %386 = vmatprep.subr.bf16.mxu0 %v355
        %387 = vmatpush1.bf16.msra.mxu0 %v354
        %388 = vmatprep.subr.bf16.mxu0 %v357
        %389 = vmatpush1.bf16.msra.mxu0 %v356
        %390 = vmatprep.subr.bf16.mxu0 %v359
        %391 = vmatpush1.bf16.msra.mxu0 %v358
        %392 = vmatprep.subr.bf16.mxu0 0
        %393 = vmatpush1.bf16.msra.mxu0 0
        %394 = vmatprep.subr.bf16.mxu0 0
        %395 = vmatpush1.bf16.msra.mxu0 0
        %396 = vmatprep.subr.bf16.mxu0 0
        %397 = vmatpush1.bf16.msra.mxu0 0
        %398 = vmatprep.subr.bf16.mxu0 0
        %399 = vmatpush1.bf16.msra.mxu0 0
        %400 = vmatprep.subr.bf16.mxu0 0
        %401 = vmatpush1.bf16.msra.mxu0 0
        %402 = vmatprep.subr.bf16.mxu0 0
        %403 = vmatpush1.bf16.msra.mxu0 0
        %404 = vmatprep.subr.bf16.mxu0 0
        %405 = vmatpush1.bf16.msra.mxu0 0
        %406 = vmatprep.subr.bf16.mxu0 0
        %407 = vmatpush1.bf16.msra.mxu0 0
        %408 = vmatprep.mubr.bf16.mxu0 0
        %409 = vmatmul.mubr.bf16.gmra.mrb[0].mxu0 %v288
        %v410 = vpop.f32.mrb[0].mxu0
        %v411 = vadd.f32 0.0, %v410
        %v412 = vpop.f32.mrb[0].mxu0
        %v413 = vadd.f32 0.0, %v412
        %v414 = vpop.f32.mrb[0].mxu0
        %v415 = vadd.f32 0.0, %v414
        %v416 = vpop.f32.mrb[0].mxu0
        %v417 = vadd.f32 0.0, %v416
        %418 = vmatprep.mubr.bf16.mxu0 0
        %419 = vmatmul.mubr.bf16.gmra.mrb[0].mxu0 %v289
        %v420 = vpop.f32.mrb[0].mxu0
        %v421 = vadd.f32 0.0, %v420
        %v422 = vpop.f32.mrb[0].mxu0
        %v423 = vadd.f32 0.0, %v422
        %v424 = vpop.f32.mrb[0].mxu0
        %v425 = vadd.f32 0.0, %v424
        %v426 = vpop.f32.mrb[0].mxu0
        %v427 = vadd.f32 0.0, %v426
        %428 = vmatprep.mubr.bf16.mxu0 0
        %429 = vmatmul.mubr.bf16.gmra.mrb[0].mxu0 %v290
        %v430 = vpop.f32.mrb[0].mxu0
        %v431 = vadd.f32 0.0, %v430
        %v432 = vpop.f32.mrb[0].mxu0
        %v433 = vadd.f32 0.0, %v432
        %v434 = vpop.f32.mrb[0].mxu0
        %v435 = vadd.f32 0.0, %v434
        %v436 = vpop.f32.mrb[0].mxu0
        %v437 = vadd.f32 0.0, %v436
        %438 = vmatprep.mubr.bf16.mxu0 0
        %439 = vmatmul.mubr.bf16.gmra.mrb[0].mxu0 %v291
        %v440 = vpop.f32.mrb[0].mxu0
        %v441 = vadd.f32 0.0, %v440
        %v442 = vpop.f32.mrb[0].mxu0
        %v443 = vadd.f32 0.0, %v442
        %v444 = vpop.f32.mrb[0].mxu0
        %v445 = vadd.f32 0.0, %v444
        %v446 = vpop.f32.mrb[0].mxu0
        %v447 = vadd.f32 0.0, %v446
        %448 = vdwg.mxu0
        %p449 = scmp.eq.s32.totalorder %s28, 0
        // Predicated region
        $region45: #{tpu_custom_call.1} parent=31 // pred_check
          %p450 = pneg %p449
        $region46: #{tpu_custom_call.1} parent=31 // pred_check_branch
          %452 = sbr.rel (%p450) target = $region48
        $region47: #{tpu_custom_call.1} parent=31 // pred_region
          %453 = vst [vmem:[#allocation2] sm:$0xff] %v411
          %454 = vst [vmem:[#allocation2 + $0x8] sm:$0xff] %v413
          %455 = vst [vmem:[#allocation2 + $0x10] sm:$0xff] %v415
          %456 = vst [vmem:[#allocation2 + $0x18] sm:$0xff] %v417
          %457 = vst [vmem:[#allocation2 + $0x20] sm:$0xff] %v421
          %458 = vst [vmem:[#allocation2 + $0x28] sm:$0xff] %v423
          %459 = vst [vmem:[#allocation2 + $0x30] sm:$0xff] %v425
          %460 = vst [vmem:[#allocation2 + $0x38] sm:$0xff] %v427
          %461 = vst [vmem:[#allocation2 + $0x40] sm:$0xff] %v431
          %462 = vst [vmem:[#allocation2 + $0x48] sm:$0xff] %v433
          %463 = vst [vmem:[#allocation2 + $0x50] sm:$0xff] %v435
          %464 = vst [vmem:[#allocation2 + $0x58] sm:$0xff] %v437
          %465 = vst [vmem:[#allocation2 + $0x60] sm:$0xff] %v441
          %466 = vst [vmem:[#allocation2 + $0x68] sm:$0xff] %v443
          %467 = vst [vmem:[#allocation2 + $0x70] sm:$0xff] %v445
          %468 = vst [vmem:[#allocation2 + $0x78] sm:$0xff] %v447
        $region48: #{tpu_custom_call.1} parent=31 // pred_fallthru
          _
        %p469 = scmp.gt.s32.totalorder %s28, 0
        // Predicated region
        $region49: #{tpu_custom_call.1} parent=31 // pred_check
          %p470 = pneg %p469
        $region50: #{tpu_custom_call.1} parent=31 // pred_check_branch
          %472 = sbr.rel (%p470) target = $region52
        $region51: #{tpu_custom_call.1} parent=31 // pred_region
          %v473 = vld [vmem:[#allocation2] sm:$0xff]
          %v474 = vld [vmem:[#allocation2 + $0x8] sm:$0xff]
          %v475 = vld [vmem:[#allocation2 + $0x10] sm:$0xff]
          %v476 = vld [vmem:[#allocation2 + $0x18] sm:$0xff]
          %v477 = vld [vmem:[#allocation2 + $0x20] sm:$0xff]
          %v478 = vld [vmem:[#allocation2 + $0x28] sm:$0xff]
          %v479 = vld [vmem:[#allocation2 + $0x30] sm:$0xff]
          %v480 = vld [vmem:[#allocation2 + $0x38] sm:$0xff]
          %v481 = vld [vmem:[#allocation2 + $0x40] sm:$0xff]
          %v482 = vld [vmem:[#allocation2 + $0x48] sm:$0xff]
          %v483 = vld [vmem:[#allocation2 + $0x50] sm:$0xff]
          %v484 = vld [vmem:[#allocation2 + $0x58] sm:$0xff]
          %v485 = vld [vmem:[#allocation2 + $0x60] sm:$0xff]
          %v486 = vld [vmem:[#allocation2 + $0x68] sm:$0xff]
          %v487 = vld [vmem:[#allocation2 + $0x70] sm:$0xff]
          %v488 = vld [vmem:[#allocation2 + $0x78] sm:$0xff]
          %v489 = vmax.f32 %v473, %v411
          %v490 = vmax.f32 %v474, %v413
          %v491 = vmax.f32 %v475, %v415
          %v492 = vmax.f32 %v476, %v417
          %v493 = vmax.f32 %v477, %v421
          %v494 = vmax.f32 %v478, %v423
          %v495 = vmax.f32 %v479, %v425
          %v496 = vmax.f32 %v480, %v427
          %v497 = vmax.f32 %v481, %v431
          %v498 = vmax.f32 %v482, %v433
          %v499 = vmax.f32 %v483, %v435
          %v500 = vmax.f32 %v484, %v437
          %v501 = vmax.f32 %v485, %v441
          %v502 = vmax.f32 %v486, %v443
          %v503 = vmax.f32 %v487, %v445
          %v504 = vmax.f32 %v488, %v447
          %505 = vst [vmem:[#allocation2] sm:$0xff] %v489
          %506 = vst [vmem:[#allocation2 + $0x8] sm:$0xff] %v490
          %507 = vst [vmem:[#allocation2 + $0x10] sm:$0xff] %v491
          %508 = vst [vmem:[#allocation2 + $0x18] sm:$0xff] %v492
          %509 = vst [vmem:[#allocation2 + $0x20] sm:$0xff] %v493
          %510 = vst [vmem:[#allocation2 + $0x28] sm:$0xff] %v494
          %511 = vst [vmem:[#allocation2 + $0x30] sm:$0xff] %v495
          %512 = vst [vmem:[#allocation2 + $0x38] sm:$0xff] %v496
          %513 = vst [vmem:[#allocation2 + $0x40] sm:$0xff] %v497
          %514 = vst [vmem:[#allocation2 + $0x48] sm:$0xff] %v498
          %515 = vst [vmem:[#allocation2 + $0x50] sm:$0xff] %v499
          %516 = vst [vmem:[#allocation2 + $0x58] sm:$0xff] %v500
          %517 = vst [vmem:[#allocation2 + $0x60] sm:$0xff] %v501
          %518 = vst [vmem:[#allocation2 + $0x68] sm:$0xff] %v502
          %519 = vst [vmem:[#allocation2 + $0x70] sm:$0xff] %v503
          %520 = vst [vmem:[#allocation2 + $0x78] sm:$0xff] %v504
        $region52: #{tpu_custom_call.1} parent=31 // pred_fallthru
          _
        %p521 = scmp.eq.s32.totalorder %s28, 3
        // Predicated region
        $region53: #{tpu_custom_call.1} parent=31 // pred_check
          %p522 = pneg %p521
        $region54: #{tpu_custom_call.1} parent=31 // pred_check_branch
          %524 = sbr.rel (%p522) target = $region56
        $region55: #{tpu_custom_call.1} parent=31 // pred_region
          %v525 = vld [vmem:[#allocation2] sm:$0xff]
          %v526 = vld [vmem:[#allocation2 + $0x8] sm:$0xff]
          %v527 = vld [vmem:[#allocation2 + $0x10] sm:$0xff]
          %v528 = vld [vmem:[#allocation2 + $0x18] sm:$0xff]
          %v529 = vld [vmem:[#allocation2 + $0x20] sm:$0xff]
          %v530 = vld [vmem:[#allocation2 + $0x28] sm:$0xff]
          %v531 = vld [vmem:[#allocation2 + $0x30] sm:$0xff]
          %v532 = vld [vmem:[#allocation2 + $0x38] sm:$0xff]
          %v533 = vld [vmem:[#allocation2 + $0x40] sm:$0xff]
          %v534 = vld [vmem:[#allocation2 + $0x48] sm:$0xff]
          %v535 = vld [vmem:[#allocation2 + $0x50] sm:$0xff]
          %v536 = vld [vmem:[#allocation2 + $0x58] sm:$0xff]
          %v537 = vld [vmem:[#allocation2 + $0x60] sm:$0xff]
          %v538 = vld [vmem:[#allocation2 + $0x68] sm:$0xff]
          %v539 = vld [vmem:[#allocation2 + $0x70] sm:$0xff]
          %v540 = vld [vmem:[#allocation2 + $0x78] sm:$0xff]
          %v541 = vld [vmem:[#allocation8] sm:$0x3]
          %v543 = vlaneseq
          %v544 = vshrl.u32 %v543, 7
          %v545 = vsub.s32 0, %v544
          %v546 = vrot.slane %v541, %v545
          %v547 = vlaneseq
          %v548 = vshrl.u32 %v547, 7
          %v549 = vsub.s32 1, %v548
          %v550 = vrot.slane %v541, %v549
          %v553 = vadd.f32 %v525, %v546
          %v554 = vadd.f32 %v526, %v550
          %v555 = vadd.f32 %v527, %v546
          %v556 = vadd.f32 %v528, %v550
          %v557 = vadd.f32 %v529, %v546
          %v558 = vadd.f32 %v530, %v550
          %v559 = vadd.f32 %v531, %v546
          %v560 = vadd.f32 %v532, %v550
          %v561 = vadd.f32 %v533, %v546
          %v562 = vadd.f32 %v534, %v550
          %v563 = vadd.f32 %v535, %v546
          %v564 = vadd.f32 %v536, %v550
          %v565 = vadd.f32 %v537, %v546
          %v566 = vadd.f32 %v538, %v550
          %v567 = vadd.f32 %v539, %v546
          %v568 = vadd.f32 %v540, %v550
          %v569 = vpack.c.bf16 %v555, %v553
          %v570 = vpack.c.bf16 %v556, %v554
          %v571 = vpack.c.bf16 %v559, %v557
          %v572 = vpack.c.bf16 %v560, %v558
          %v573 = vpack.c.bf16 %v563, %v561
          %v574 = vpack.c.bf16 %v564, %v562
          %v575 = vpack.c.bf16 %v567, %v565
          %v576 = vpack.c.bf16 %v568, %v566
          %v585 = vunpack.c.l.b16 %v569
          %v586 = vunpack.c.l.b16 %v570
          %v587 = vunpack.c.h.b16 %v569
          %v588 = vunpack.c.h.b16 %v570
          %v589 = vunpack.c.l.b16 %v571
          %v590 = vunpack.c.l.b16 %v572
          %v591 = vunpack.c.h.b16 %v571
          %v592 = vunpack.c.h.b16 %v572
          %v593 = vunpack.c.l.b16 %v573
          %v594 = vunpack.c.l.b16 %v574
          %v595 = vunpack.c.h.b16 %v573
          %v596 = vunpack.c.h.b16 %v574
          %v597 = vunpack.c.l.b16 %v575
          %v598 = vunpack.c.l.b16 %v576
          %v599 = vunpack.c.h.b16 %v575
          %v600 = vunpack.c.h.b16 %v576
          %v601 = vpack.c.b16 %v586, %v585
          %v602 = vpack.c.b16 %v588, %v587
          %v603 = vpack.c.b16 %v590, %v589
          %v604 = vpack.c.b16 %v592, %v591
          %v605 = vpack.c.b16 %v594, %v593
          %v606 = vpack.c.b16 %v596, %v595
          %v607 = vpack.c.b16 %v598, %v597
          %v608 = vpack.c.b16 %v600, %v599
          %617 = vst [vmem:[%s244] sm:$0xff] %v601
          %618 = vst [vmem:[%s244 + $0x8] sm:$0xff] %v602
          %619 = vst [vmem:[%s244 + $0x10] sm:$0xff] %v603
          %620 = vst [vmem:[%s244 + $0x18] sm:$0xff] %v604
          %621 = vst [vmem:[%s244 + $0x20] sm:$0xff] %v605
          %622 = vst [vmem:[%s244 + $0x28] sm:$0xff] %v606
          %623 = vst [vmem:[%s244 + $0x30] sm:$0xff] %v607
          %624 = vst [vmem:[%s244 + $0x38] sm:$0xff] %v608
        $region56: #{tpu_custom_call.1} parent=31 // pred_fallthru
          _
        %s625 = sand.u32 %s122, 1
        %s626 = scalar_lea.sflag [#allocation5], %s625
        %s627 = sand.u32 %s122, 1
        %s628 = smul.addr %s627, 64
        %s629 = scalar_lea.vmem [#allocation9], %s628
        // Predicated region
        $region57: #{tpu_custom_call.1} parent=31 // pred_check
          %p630 = pneg %p132
        $region58: #{tpu_custom_call.1} parent=31 // pred_check_branch
          %632 = sbr.rel (%p630) target = $region60
        $region59: #{tpu_custom_call.1} parent=31 // pred_region
          %s633 = smul.u32 8, %s27
          %s635 = ssub.s32 1024, 1024
          %636 = vsyncadd %s626, %s635
          %s637 = smul.addr %s633, 2
          %s638 = smul.addr %s26, 16
          %s639 = sadd.s32 %s637, %s638
          %s640 = smul.addr %s639, 64
          %s641 = scalar_lea.hbm %s3, %s640
          %s642 = sshll.u32 %s629, 4
          %s643 = int_to_ptr.vmem [resolvable:$true] %s642
          %648 = dma.vmem_to_hbm [thread:$0]  %s643, 1024, %s641, %s626, 128, 128, 8
        $region60: #{tpu_custom_call.1} parent=31 // pred_fallthru
          _
      $region32: #{tpu_custom_call.1} parent=5 // pred_fallthru
        _
      %p649 = scmp.le.s32.totalorder 2, %s16
      // Predicated region
      $region61: #{tpu_custom_call.1} parent=5 // pred_check
        %p650 = pneg %p649
      $region62: #{tpu_custom_call.1} parent=5 // pred_check_branch
        %652 = sbr.rel (%p650) target = $region64
      $region63: #{tpu_custom_call.1} parent=5 // pred_region
        %s653 = ssub.s32 %s16, 2
        // Predicated region
        $region65: #{tpu_custom_call.1} parent=63 // pred_check
          %p654 = pneg %p138
        $region66: #{tpu_custom_call.1} parent=63 // pred_check_branch
          %656 = sbr.rel (%p654) target = $region68
        $region67: #{tpu_custom_call.1} parent=63 // pred_region
          %s657 = sand.u32 %s123, 1
          %s658 = scalar_lea.sflag [#allocation5], %s657
          %s659 = sand.u32 %s123, 1
          %s660 = smul.addr %s659, 64
          %s661 = scalar_lea.vmem [#allocation9], %s660
          %662 = dma.done %s658, 1024
        $region68: #{tpu_custom_call.1} parent=63 // pred_fallthru
          _
      $region64: #{tpu_custom_call.1} parent=5 // pred_fallthru
        _
    $region6: #{tpu_custom_call.1} parent=1 // loop_footer
      %s20 = sadd.s32 1, %s16
    $region7: #{tpu_custom_call.1} parent=1 // loop_footer_branch
      %15 = sbr.rel target = $region3
    $region8: #{tpu_custom_call.1} parent=1 // loop_exit
      _
    %663 = vsyncpa [#allocation4], 1
    %s664 = scalar_lea.sflag [#allocation4], 1
    %665 = vsyncpa %s664, 1
    %666 = vsyncpa [#allocation7], 1
    %667 = vsyncpa [#allocation5], 1
    %s668 = scalar_lea.sflag [#allocation5], 1
    %669 = vsyncpa %s668, 1

</llo_original>
